<compile_context>
chip_gen: v6e
topology: v6e:2x2x1
jax: 0.10.0
libtpu: 0.0.40
codegen_flags: <defaults>
</compile_context>

<pallas_src>
import functools
import numpy as np
import jax
import jax.numpy as jnp
from jax.experimental import pallas as pl
from jax.experimental.pallas import tpu as pltpu


# --------------------------------------------------------------------------- #
# PE table (identical math to the PyTorch __init__)
# --------------------------------------------------------------------------- #
def _build_pe_table(embed_dim: int, max_seq_length: int) -> np.ndarray:
    position = np.arange(max_seq_length, dtype=np.float32)[:, None]            # [L, 1]
    div_term = np.exp(
        np.arange(0, embed_dim, 2, dtype=np.float32) * (-np.log(10000.0) / embed_dim)
    )                                                                           # [E/2]
    pe = np.zeros((max_seq_length, embed_dim), dtype=np.float32)
    pe[:, 0::2] = np.sin(position * div_term)
    pe[:, 1::2] = np.cos(position * div_term)
    return pe                                                                   # numpy f32 [L, E]


# --------------------------------------------------------------------------- #
# Per-generation tuning: (target block bytes, scoped-VMEM limit override)
# --------------------------------------------------------------------------- #
def _device_tuning():
    try:
        kind = jax.devices()[0].device_kind.lower()
    except Exception:
        kind = ""
    if "v7" in kind:
        # 64 MiB physical VMEM; 2x(x)+2x(out) 8 MiB buffers + pe needs >32 MiB scoped.
        return 8 * 1024 * 1024, 48 * 1024 * 1024
    if "v6" in kind:
        # 4 MiB blocks fit the 32 MiB default scoped VMEM comfortably.
        return 4 * 1024 * 1024, None
    if "v5" in kind:
        # v5e default scoped VMEM is only 16 MiB; keep 2 MiB blocks.
        return 2 * 1024 * 1024, None
    return 2 * 1024 * 1024, None


# --------------------------------------------------------------------------- #
# Tile selection
# --------------------------------------------------------------------------- #
def _choose_tiles(batch: int, n_cols: int, dtype, target_block_bytes: int):
    """Pick (tB, tN): lane-dense, (8,128)-legal, ~target_block_bytes per x block."""
    itemsize = jnp.dtype(dtype).itemsize
    # Sublane granularity is dtype-aware: f32 -> 8, bf16 -> 16, int8/fp8 -> 32.
    gran = max(8, 32 // itemsize)

    # Sublane (second-minor) tile: full batch when small (legal: equals full dim),
    # otherwise a multiple of `gran` sized toward the byte budget so each grid
    # step amortizes the ~0.35 us fixed overhead.
    if batch <= gran:
        tB = batch
    else:
        rows_budget = max(gran, target_block_bytes // max(1, n_cols * itemsize))
        tB = min((batch // gran) * gran, (rows_budget // gran) * gran)
        tB = max(tB, gran)

    # Lane (minor) tile: full flattened width when it fits the budget, otherwise
    # a multiple of 128 near the budget, preferring one that divides n_cols so
    # there is no masked tail block (unmasked lane-dense vst).
    if n_cols <= 128 or tB * n_cols * itemsize <= target_block_bytes:
        tN = n_cols
    else:
        tN = max(128, (target_block_bytes // (tB * itemsize)) // 128 * 128)
        for cand in range(tN, max(128, tN // 2) - 1, -128):
            if n_cols % cand == 0:
                tN = cand
                break
    return tB, tN


# --------------------------------------------------------------------------- #
# Kernel + pallas_call wrapper
# --------------------------------------------------------------------------- #
def _add_pe_kernel(x_ref, pe_ref, o_ref):
    # x_ref/o_ref: (tB, tN) tile of the flattened activations
    # pe_ref:      (1,  tN) tile of the flattened PE row (sublane-broadcast add)
    o_ref[...] = x_ref[...] + pe_ref[...]


def _pe_forward_impl(x, pe_row, *, target_block_bytes, vmem_limit_bytes):
    """x: [B, S, E] (donated under jit); pe_row: [1, S*E] pre-flattened PE."""
    B, S, E = x.shape
    N = S * E
    x2d = x.reshape(B, N)                      # contiguous -> pure layout metadata

    tB, tN = _choose_tiles(B, N, x.dtype, target_block_bytes)
    grid = (pl.cdiv(N, tN), pl.cdiv(B, tB))    # pe-column axis OUTER, batch INNER

    out2d = pl.pallas_call(
        _add_pe_kernel,
        out_shape=jax.ShapeDtypeStruct((B, N), x.dtype),
        grid=grid,
        in_specs=[
            pl.BlockSpec((tB, tN), lambda j, i: (i, j)),   # x tile
            # pe tile: constant across the inner batch axis -> stays resident.
            # (pipeline_mode=pl.Buffered(1) would shave ~1 buffer of VMEM on
            #  v7x; omitted for portability.)
            pl.BlockSpec((1, tN), lambda j, i: (0, j)),
        ],
        out_specs=pl.BlockSpec((tB, tN), lambda j, i: (i, j)),
        input_output_aliases={0: 0},           # in-place add into x's (donated) buffer
        compiler_params=pltpu.CompilerParams(
            dimension_semantics=("parallel", "parallel"),
            vmem_limit_bytes=vmem_limit_bytes,
        ),
    )(x2d, pe_row)

    return out2d.reshape(B, S, E)


# --------------------------------------------------------------------------- #
# Module-like wrapper (caches flattened PE rows, jits + donates x)
# --------------------------------------------------------------------------- #
class PallasPositionalEncoding:
    """Pallas TPU equivalent of the PyTorch PositionalEncoding module.

    NOTE: the add is performed in x.dtype (pe pre-cast once at init/cache time);
    for f32 inputs this is bit-identical to PyTorch.  For bf16 inputs PyTorch's
    f32 `pe` buffer would promote the result to f32 — here we keep x.dtype.
    NOTE: x is DONATED by the jitted forward (in-place add); do not reuse the
    input array after calling.
    """

    def __init__(self, embed_dim: int, max_seq_length: int = 5000):
        self.embed_dim = embed_dim
        self.max_seq_length = max_seq_length
        self.pe_np = _build_pe_table(embed_dim, max_seq_length)   # f32 [L, E]
        self._pe_rows = {}                                        # (S, dtype) -> [1, S*E]
        target, vmem = _device_tuning()
        self._fwd = jax.jit(
            functools.partial(
                _pe_forward_impl,
                target_block_bytes=target,
                vmem_limit_bytes=vmem,
            ),
            donate_argnums=(0,),
        )

    def pe_row(self, seq_len: int, dtype) -> jnp.ndarray:
        key = (seq_len, jnp.dtype(dtype).name)
        row = self._pe_rows.get(key)
        if row is None:
            row = jnp.asarray(
                self.pe_np[:seq_len].reshape(1, seq_len * self.embed_dim), dtype=dtype
            )
            self._pe_rows[key] = row
        return row

    def __call__(self, x: jnp.ndarray) -> jnp.ndarray:
        B, S, E = x.shape
        assert E == self.embed_dim and S <= self.max_seq_length
        return self._fwd(x, self.pe_row(S, x.dtype))


# --------------------------------------------------------------------------- #
if __name__ == "__main__":
    # --- primary check: module-shaped demo (B=2, S=8, E=32) ------------------
    batch, seq_len, embed_dim = 2, 8, 32
    max_seq_length = 64

    key = jax.random.PRNGKey(0)
    x = jax.random.normal(key, (batch, seq_len, embed_dim), dtype=jnp.float32)

    pos_enc = PallasPositionalEncoding(embed_dim, max_seq_length)

    # Reference computed BEFORE the kernel call (x is donated / added in place).
    ref = np.asarray(x) + pos_enc.pe_np[None, :seq_len, :]

    out = jax.block_until_ready(pos_enc(x))
    np.testing.assert_allclose(np.asarray(out), ref, rtol=1e-6, atol=1e-6)

    # --- secondary check: force a multi-block grid (tiled lanes + ragged batch)
    pos_enc2 = PallasPositionalEncoding(embed_dim=128, max_seq_length=32)
    key2 = jax.random.PRNGKey(0)
    x2 = jax.random.normal(key2, (10, 12, 128), dtype=jnp.float32)
    ref2 = np.asarray(x2) + pos_enc2.pe_np[None, :12, :]
    out2 = _pe_forward_impl(                       # eager call, tiny budget -> grid (12, 2)
        x2, pos_enc2.pe_row(12, x2.dtype),
        target_block_bytes=4096, vmem_limit_bytes=None,
    )
    out2 = jax.block_until_ready(out2)
    np.testing.assert_allclose(np.asarray(out2), ref2, rtol=1e-6, atol=1e-6)

    print("KERNEL_OK")
</pallas_src>

<mosaic_0001>
module attributes {stable_mosaic.version = 11 : i64} {
  func.func @_add_pe_kernel(%arg0: i32, %arg1: i32, %arg2: memref<2x256xf32, #tpu.memory_space<vmem>>, %arg3: memref<1x256xf32, #tpu.memory_space<vmem>>, %arg4: memref<2x256xf32, #tpu.memory_space<vmem>>) attributes {dimension_semantics = [#tpu.dimension_semantics<parallel>, #tpu.dimension_semantics<parallel>], iteration_bounds = array<i64: 1, 1>, scalar_prefetch = 0 : i64, scratch_operands = 0 : i64, tpu.core_type = #tpu.core_type<tc>, window_params = [{transform_indices = @transform_0, window_bounds = array<i64: 2, 256>}, {transform_indices = @transform_1, window_bounds = array<i64: 1, 256>}, {transform_indices = @transform_2, window_bounds = array<i64: 2, 256>}]} {
    %c0 = arith.constant 0 : index
    %c0_0 = arith.constant 0 : index
    %0 = vector.load %arg2[%c0, %c0_0] : memref<2x256xf32, #tpu.memory_space<vmem>>, vector<2x256xf32>
    %c0_1 = arith.constant 0 : index
    %c0_2 = arith.constant 0 : index
    %1 = vector.load %arg3[%c0_1, %c0_2] : memref<1x256xf32, #tpu.memory_space<vmem>>, vector<1x256xf32>
    %2 = vector.broadcast %1 : vector<1x256xf32> to vector<2x256xf32>
    %3 = arith.addf %0, %2 : vector<2x256xf32>
    %c0_3 = arith.constant 0 : index
    %c0_4 = arith.constant 0 : index
    %4 = vector.load %arg4[%c0_3, %c0_4] : memref<2x256xf32, #tpu.memory_space<vmem>>, vector<2x256xf32>
    tpu.vector_store %arg4[%c0_3, %c0_4], %3 {strides = array<i32>} : memref<2x256xf32, #tpu.memory_space<vmem>>, vector<2x256xf32>,
    return
  }
  func.func @transform_0(%arg0: i32, %arg1: i32) -> (i32, i32) {
    %c0_i32 = arith.constant 0 : i32
    return %arg1, %arg0 : i32, i32
  }
  func.func @transform_1(%arg0: i32, %arg1: i32) -> (i32, i32) {
    %c0_i32 = arith.constant 0 : i32
    %c0_i32_0 = arith.constant 0 : i32
    return %c0_i32, %arg0 : i32, i32
  }
  func.func @transform_2(%arg0: i32, %arg1: i32) -> (i32, i32) {
    %c0_i32 = arith.constant 0 : i32
    return %arg1, %arg0 : i32, i32
  }
}

</mosaic_0001>

<llo_original>
// kernel: _pe_forward_impl.1
$region0: #{_pe_forward_impl.1}
  #allocation0 [shape = 'u32[]', space=smem, size = 0x4, offset = 0x4, fixed_abs, tag = 'smem constant byte address 0x4 - core index']
  #allocation1 [shape = 'u32[144,128]{1,0:T(1,128)}', space=vmem, size = 0x12000, scoped, tag = 'internal scratch']
  %s0 = inlined_call_operand.vmem [shape: f32[2,256], index: 0, kind: input, shape index: {}, may-alias: {0,2}]
  %s1 = inlined_call_operand.vmem [shape: f32[1,256], index: 1, kind: input, shape index: {}]
  %s2 = inlined_call_operand.vmem [shape: f32[2,256], index: 2, kind: output, shape index: {}, may-alias: {0,2}]
  %s3 = sld [smem:[#allocation0]]
  $region18: #{_pe_forward_impl.1} parent=0
    _
  %s5 = ssub.s32 1, %s3
  %s6 = scalar_select 0, %s5, %s3
  // Predicated region
  $region2: #{_pe_forward_impl.1} parent=0 // pred_check
    _
  $region3: #{_pe_forward_impl.1} parent=0 // pred_check_branch
    %8 = sbr.rel (0) target = $region5
  $region4: #{_pe_forward_impl.1} parent=0 // pred_region
    _
  $region5: #{_pe_forward_impl.1} parent=0 // pred_fallthru
    _
  // Predicated region
  $region6: #{_pe_forward_impl.1} parent=0 // pred_check
    _
  $region7: #{_pe_forward_impl.1} parent=0 // pred_check_branch
    %10 = sbr.rel (0) target = $region9
  $region8: #{_pe_forward_impl.1} parent=0 // pred_region
    _
  $region9: #{_pe_forward_impl.1} parent=0 // pred_fallthru
    _
  %v11 = vld [vmem:[%s0] sm:$0xf]
  %v12 = vld [vmem:[%s1] sm:$0x3]
  %v14 = vlaneseq
  %v15 = vshrl.u32 %v14, 7
  %v16 = vsub.s32 0, %v15
  %v17 = vrot.slane %v12, %v16
  %v18 = vlaneseq
  %v19 = vshrl.u32 %v18, 7
  %v20 = vsub.s32 1, %v19
  %v21 = vrot.slane %v12, %v20
  %v22 = vcombine.low %v17, %v21
  %v24 = vunpack.c.l.s4 1983009808
  %v25 = vunpack.c.0.s8 %v24
  %v26 = vlaneseq
  %v27 = vshrl.u32 %v26, 7
  %v28 = vsub.s32 %v25, %v27
  %v29 = vrot.slane %v22, %v28
  %v31 = vadd.f32 %v11, %v29
  %32 = vst [vmem:[%s2] sm:$0xf] %v31
  // Predicated region
  $region10: #{_pe_forward_impl.1} parent=0 // pred_check
    _
  $region11: #{_pe_forward_impl.1} parent=0 // pred_check_branch
    %34 = sbr.rel (0) target = $region13
  $region12: #{_pe_forward_impl.1} parent=0 // pred_region
    _
  $region13: #{_pe_forward_impl.1} parent=0 // pred_fallthru
    _
  // Predicated region
  $region14: #{_pe_forward_impl.1} parent=0 // pred_check
    _
  $region15: #{_pe_forward_impl.1} parent=0 // pred_check_branch
    %36 = sbr.rel (0) target = $region17
  $region16: #{_pe_forward_impl.1} parent=0 // pred_region
    _
  $region17: #{_pe_forward_impl.1} parent=0 // pred_fallthru
    _

</llo_original>
